<compile_context>
chip_gen: v6e
topology: v6e:2x2x1
jax: 0.10.0
libtpu: 0.0.40
codegen_flags: <defaults>
</compile_context>

<pallas_src>
import math
import functools

import jax
import jax.numpy as jnp
from jax.experimental import pallas as pl
from jax.experimental.pallas import tpu as pltpu


NEG_BIG = -9e15  # matches the module's masked_fill value


# ----------------------------- hardware helpers ----------------------------- #
def _tpu_vmem_capacity_bytes():
    try:
        return int(getattr(pltpu.get_tpu_info(), "vmem_capacity_bytes", 0))
    except Exception:
        return 0


def _vmem_limit_bytes():
    cap = _tpu_vmem_capacity_bytes()
    if cap < (64 << 20):
        return None                       # unknown / small-VMEM part: keep default
    return int(min(int(0.75 * cap), 128 << 20))


def _pick_tile(dim, candidates):
    """Largest candidate that exactly divides `dim`, else the full dim."""
    for c in candidates:
        if dim >= c and dim % c == 0:
            return c
    return dim


def _seq_tile(seq_len):
    # Generation-aware: 512 on 128 MiB VMEM chips (v5e/v6e), cap 256 on v7x.
    max_tile = 512 if _tpu_vmem_capacity_bytes() >= (100 << 20) else 256
    for c in (512, 256, 128):
        if c <= max_tile and seq_len % c == 0:
            return c
    return seq_len


# --------------------------- tiled Linear kernel --------------------------- #
def _linear_kernel(x_ref, w_ref, b_ref, o_ref, acc_ref):
    # x: (tm, tk), w: (tk, tn) [pre-transposed at load time], b: (1, tn) f32
    k = pl.program_id(2)

    @pl.when(k == 0)
    def _init():
        acc_ref[...] = jnp.zeros_like(acc_ref)

    acc_ref[...] += jnp.dot(x_ref[...], w_ref[...],
                            preferred_element_type=jnp.float32)

    @pl.when(k == pl.num_programs(2) - 1)
    def _finalize():
        o_ref[...] = (acc_ref[...] + b_ref[...].astype(jnp.float32)).astype(o_ref.dtype)


def pallas_linear(x2d, w_kn, b, out_dtype=None):
    """y = x2d @ w_kn + b.  x2d: (M, K); w_kn: (K, N) (pre-transposed once at
    parameter-load time); b: (N,) f32.  MXU operands in x2d/w_kn dtype (bf16 in
    the production path), accumulation in f32 VMEM scratch."""
    M, K = x2d.shape
    N = w_kn.shape[1]
    out_dtype = x2d.dtype if out_dtype is None else out_dtype
    tm = _pick_tile(M, (512, 256, 128, 64, 32, 16, 8))  # large tm -> fewer weight re-reads
    tn = _pick_tile(N, (512, 256, 128))
    tk = _pick_tile(K, (512, 256, 128))
    return pl.pallas_call(
        _linear_kernel,
        out_shape=jax.ShapeDtypeStruct((M, N), out_dtype),
        grid=(M // tm, N // tn, K // tk),
        in_specs=[
            pl.BlockSpec((tm, tk), lambda i, j, k: (i, k)),
            pl.BlockSpec((tk, tn), lambda i, j, k: (k, j)),
            pl.BlockSpec((1, tn), lambda i, j, k: (0, j)),
        ],
        out_specs=pl.BlockSpec((tm, tn), lambda i, j, k: (i, j)),
        scratch_shapes=[pltpu.VMEM((tm, tn), jnp.float32)],
        compiler_params=pltpu.CompilerParams(
            dimension_semantics=("parallel", "parallel", "arbitrary"),
            vmem_limit_bytes=_vmem_limit_bytes()),
    )(x2d, w_kn, b.reshape(1, N))


# ----------------------- flash-style GQA attention ------------------------- #
def _gqa_flash_kernel(*refs, group_num, heads_per_group, head_dim, mask_mode):
    if mask_mode == "dense":
        q_ref, k_ref, v_ref, mask_ref, o_ref, q_s, m_s, l_s, acc_s = refs
    else:
        q_ref, k_ref, v_ref, o_ref, q_s, m_s, l_s, acc_s = refs
        mask_ref = None

    hpg = heads_per_group
    hd = head_dim
    tq = q_ref.shape[0]
    tk = k_ref.shape[0]
    qi = pl.program_id(1)
    ki = pl.program_id(2)
    n_kv = pl.num_programs(2)

    @pl.when(ki == 0)
    def _init():
        m_s[...] = jnp.full_like(m_s, -jnp.inf)
        l_s[...] = jnp.zeros_like(l_s)
        acc_s[...] = jnp.zeros_like(acc_s)
        # HOISTED per-q-tile work (previously done every KV step): the softmax
        # scale is already folded into the Q projection weights, and the
        # (tq, nh*hd) -> per-group, head-major (hpg*tq, hd) relayout is staged
        # once into VMEM scratch.  Static column slices only (no dyn. slicing).
        qb = q_ref[...]                                        # (tq, nh*hd)
        for g in range(group_num):
            for h in range(hpg):
                col = (g * hpg + h) * hd
                q_s[g, h * tq:(h + 1) * tq, :] = qb[:, col:col + hd]

    def _step():
        kb = k_ref[...]                                        # (tk, G*hd)
        vb = v_ref[...]
        # Additive mask bias (f32), built once per KV step, shared by all groups.
        # s + (-9e15) is bit-identical to masked_fill(-9e15) in f32 for |s|<5e8.
        if mask_mode == "dense":
            bias_qk = jnp.where(mask_ref[...] != 0, 0.0, NEG_BIG).astype(jnp.float32)
        elif mask_mode == "causal":
            q_pos = qi * tq + jax.lax.broadcasted_iota(jnp.int32, (tq, tk), 0)
            k_pos = ki * tk + jax.lax.broadcasted_iota(jnp.int32, (tq, tk), 1)
            bias_qk = jnp.where(q_pos >= k_pos, 0.0, NEG_BIG).astype(jnp.float32)
        else:
            bias_qk = None
        if bias_qk is not None:
            # rows are head-major: row = h*tq + q
            bias = jnp.broadcast_to(bias_qk[None], (hpg, tq, tk)).reshape(hpg * tq, tk)

        # TODO(synk): for large group counts, move the group loop onto a grid
        # axis (needs hd-aligned lane blocks) instead of this static unroll.
        for g in range(group_num):
            qg = q_s[g]                                        # (hpg*tq, hd) staged
            kg = kb[:, g * hd:(g + 1) * hd]                    # (tk, hd)
            vg = vb[:, g * hd:(g + 1) * hd]                    # (tk, hd)
            # Q @ K^T on the MXU (f32 accumulate).
            # TODO(synk): verify via pl.lower_as_mlir that this rhs-transposed
            # contraction does not emit a per-tile vxpose; if it does, emit K^T
            # from the projection instead.
            s = jax.lax.dot_general(
                qg, kg, dimension_numbers=(((1,), (1,)), ((), ())),
                preferred_element_type=jnp.float32)            # (hpg*tq, tk)
            if bias_qk is not None:
                s = s + bias
            m_prev = m_s[g]
            m_new = jnp.maximum(m_prev, jnp.max(s, axis=-1, keepdims=True))
            alpha = jnp.exp(m_prev - m_new)
            p = jnp.exp(s - m_new)
            l_s[g] = alpha * l_s[g] + jnp.sum(p, axis=-1, keepdims=True)
            acc_s[g] = alpha * acc_s[g] + jnp.dot(
                p.astype(vb.dtype), vg, preferred_element_type=jnp.float32)
            m_s[g] = m_new

    if mask_mode == "causal":
        # Skip KV tiles that are entirely in the future of this query tile.
        pl.when(ki * tk <= qi * tq + (tq - 1))(_step)
    else:
        _step()

    @pl.when(ki == n_kv - 1)
    def _finalize():
        for g in range(group_num):
            l = l_s[g]
            inv_l = pl.reciprocal(l, approx=True)              # EUP slot
            inv_l = inv_l * (2.0 - l * inv_l)                  # one Newton step
            out_g = acc_s[g] * inv_l                           # (hpg*tq, hd) f32
            # One batched minor-dims transpose + ONE contiguous store per group
            # (was per-head).  Output layout (nh, hd, tq) IS the module's
            # transpose(-1,-2).contiguous().view epilogue; lane axis = seq tile.
            out3 = out_g.reshape(hpg, tq, hd)
            o_ref[g * hpg:(g + 1) * hpg, :, :] = jnp.swapaxes(
                out3, 1, 2).astype(o_ref.dtype)


def pallas_gqa_flash_attention(q, k, v, mask_i8=None, *, num_heads, group_num,
                               head_dim, mask_mode):
    """q: (B, S, nh*hd); k, v: (B, S, G*hd); mask_i8: (B, 1, S, S) int8 (dense mode).
    Returns (B, nh, hd, S)."""
    B, S, H = q.shape
    g_dim = k.shape[-1]
    hpg = num_heads // group_num
    tq = _seq_tile(S)
    tk = _seq_tile(S)
    kernel = functools.partial(
        _gqa_flash_kernel, group_num=group_num, heads_per_group=hpg,
        head_dim=head_dim, mask_mode=mask_mode)
    in_specs = [
        pl.BlockSpec((None, tq, H), lambda b, qi, ki: (b, qi, 0)),
        pl.BlockSpec((None, tk, g_dim), lambda b, qi, ki: (b, ki, 0)),
        pl.BlockSpec((None, tk, g_dim), lambda b, qi, ki: (b, ki, 0)),
    ]
    args = [q, k, v]
    if mask_mode == "dense":
        in_specs.append(
            pl.BlockSpec((None, None, tq, tk), lambda b, qi, ki: (b, 0, qi, ki)))
        args.append(mask_i8)
    return pl.pallas_call(
        kernel,
        out_shape=jax.ShapeDtypeStruct((B, num_heads, head_dim, S), q.dtype),
        grid=(B, S // tq, S // tk),                            # KV (reduction) axis last
        in_specs=in_specs,
        out_specs=pl.BlockSpec((None, num_heads, head_dim, tq),
                               lambda b, qi, ki: (b, 0, 0, qi)),
        scratch_shapes=[
            pltpu.VMEM((group_num, hpg * tq, head_dim), q.dtype),      # staged Q
            pltpu.VMEM((group_num, hpg * tq, 1), jnp.float32),         # running max
            pltpu.VMEM((group_num, hpg * tq, 1), jnp.float32),         # running sum
            pltpu.VMEM((group_num, hpg * tq, head_dim), jnp.float32),  # accumulator
        ],
        compiler_params=pltpu.CompilerParams(
            dimension_semantics=("parallel", "parallel", "arbitrary"),
            vmem_limit_bytes=_vmem_limit_bytes()),
    )(*args)


# -------------------- parameter-load-time preprocessing -------------------- #
def prepare_params(params, head_dim, compute_dtype):
    """Done ONCE at parameter-load time (not per forward):
       * fuse Q/K/V weights & biases (one projection kernel, x read once),
       * fold the 1/sqrt(head_dim) softmax scale into the Q weights/bias,
       * pre-transpose weights to (K, N) so the matmul kernels see a canonical
         (M,K)x(K,N) contraction,
       * cast MXU operands to the compute dtype (bf16); biases stay f32."""
    scale = 1.0 / math.sqrt(head_dim)
    w_qkv = jnp.concatenate(
        [params["qw_w"] * scale, params["kw_w"], params["vw_w"]], axis=0)
    b_qkv = jnp.concatenate(
        [params["qw_b"] * scale, params["kw_b"], params["vw_b"]], axis=0)
    return {
        "w_qkv": jnp.asarray(w_qkv.T, compute_dtype),          # (H, H + 2*g_dim)
        "b_qkv": jnp.asarray(b_qkv, jnp.float32),
        "w_o": jnp.asarray(params["ow_w"].T, compute_dtype),   # (H, H)
        "b_o": jnp.asarray(params["ow_b"], jnp.float32),
    }


# ------------------------------ Full forward ------------------------------- #
def gqa_forward(x, prepped, attention_mask, *, num_heads, group_num,
                compute_dtype=jnp.bfloat16, mask_mode="dense"):
    """GroupQueryAttention.forward.
    mask_mode: "dense"  -> stream attention_mask as int8 tiles (general case),
               "causal" -> generate the causal mask in-kernel (no O(S^2) HBM reads),
               "none"   -> no masking (attention_mask is None)."""
    B, S, H = x.shape
    head_dim = H // num_heads
    g_dim = head_dim * group_num

    x2d = x.astype(compute_dtype).reshape(B * S, H)
    qkv = pallas_linear(x2d, prepped["w_qkv"], prepped["b_qkv"],
                        out_dtype=compute_dtype)               # (B*S, H + 2*g_dim)

    # Column splits only -- no (B,S,nh,hd)->(B,nh,S,hd) transposes; the attention
    # BlockSpecs pick heads/groups straight out of the projection layout.
    qx = qkv[:, :H].reshape(B, S, H)
    kx = qkv[:, H:H + g_dim].reshape(B, S, g_dim)
    vx = qkv[:, H + g_dim:].reshape(B, S, g_dim)

    mask_i8 = None
    if mask_mode == "dense":
        if attention_mask is None:
            mask_mode = "none"
        else:
            mask_i8 = (attention_mask != 0).astype(jnp.int8)   # 4x less DMA than f32

    attn = pallas_gqa_flash_attention(
        qx, kx, vx, mask_i8, num_heads=num_heads, group_num=group_num,
        head_dim=head_dim, mask_mode=mask_mode)                # (B, nh, hd, S)
    # The module's transpose(-1,-2).contiguous().view epilogue is already the
    # kernel's output layout -> free row-major reshape.
    attn2d = attn.reshape(B * S, H)

    out = pallas_linear(attn2d, prepped["w_o"], prepped["b_o"],
                        out_dtype=jnp.float32)
    return out.reshape(B, S, H)


# ------------------------ Pure-JAX reference check ------------------------- #
def reference_forward(x, params, attention_mask, *, num_heads, group_num):
    B, S, H = x.shape
    head_dim = H // num_heads

    def lin(t, w, b):
        return t @ w.T + b

    qx = lin(x, params["qw_w"], params["qw_b"])
    kx = lin(x, params["kw_w"], params["kw_b"])
    vx = lin(x, params["vw_w"], params["vw_b"])
    q = qx.reshape(B, S, num_heads, head_dim).transpose(0, 2, 1, 3)
    k = kx.reshape(B, S, group_num, head_dim).transpose(0, 2, 1, 3)
    v = vx.reshape(B, S, group_num, head_dim).transpose(0, 2, 1, 3)
    rep = num_heads // group_num
    k = jnp.repeat(k, rep, axis=1)
    v = jnp.repeat(v, rep, axis=1)
    scores = jnp.einsum("bhqd,bhkd->bhqk", q, k) / math.sqrt(head_dim)
    if attention_mask is not None:
        scores = jnp.where(attention_mask == 0, NEG_BIG, scores)
    probs = jax.nn.softmax(scores, axis=-1)
    aw = jnp.einsum("bhqk,bhkd->bhqd", probs, v)
    # Reproduce the module's transpose(-1,-2).contiguous().view(B, S, nh*hd).
    aw = jnp.swapaxes(aw, -1, -2).reshape(B, S, num_heads * head_dim)
    return lin(aw, params["ow_w"], params["ow_b"])


# ---------------------------------- Main ----------------------------------- #
if __name__ == "__main__":
    B, S, H = 2, 8, 32
    num_heads, group_num = 4, 2
    head_dim = H // num_heads

    key = jax.random.PRNGKey(0)
    keys = jax.random.split(key, 10)

    def init_linear(kw, kb, out_f, in_f):
        bound = 1.0 / math.sqrt(in_f)
        w = jax.random.uniform(kw, (out_f, in_f), jnp.float32, -bound, bound)
        b = jax.random.uniform(kb, (out_f,), jnp.float32, -bound, bound)
        return w, b

    params = {}
    params["qw_w"], params["qw_b"] = init_linear(keys[0], keys[1], H, H)
    params["kw_w"], params["kw_b"] = init_linear(
        keys[2], keys[3], head_dim * group_num, H)
    params["vw_w"], params["vw_b"] = init_linear(
        keys[4], keys[5], head_dim * group_num, H)
    params["ow_w"], params["ow_b"] = init_linear(keys[6], keys[7], H, H)

    x = jax.random.normal(keys[8], (B, S, H), jnp.float32)
    # causal mask, broadcastable to (B, num_heads, S, S); 1 = attend, 0 = masked
    mask = jnp.broadcast_to(
        jnp.tril(jnp.ones((S, S), jnp.float32))[None, None], (B, 1, S, S))

    ref = reference_forward(x, params, mask, num_heads=num_heads, group_num=group_num)

    # Production path: bf16 MXU operands (f32 accumulation) + in-kernel causal mask.
    prepped_bf16 = prepare_params(params, head_dim, jnp.bfloat16)
    out_bf16 = jax.block_until_ready(gqa_forward(
        x, prepped_bf16, None, num_heads=num_heads, group_num=group_num,
        compute_dtype=jnp.bfloat16, mask_mode="causal"))
    err_bf16 = float(jnp.max(jnp.abs(out_bf16 - ref)))
    # tolerance sized for bf16 operand rounding
    assert jnp.allclose(out_bf16, ref, atol=8e-2, rtol=8e-2), f"bf16 max_err={err_bf16}"

    # Exactness path: f32 compute + general dense (streamed int8) mask.
    prepped_f32 = prepare_params(params, head_dim, jnp.float32)
    out_f32 = jax.block_until_ready(gqa_forward(
        x, prepped_f32, mask, num_heads=num_heads, group_num=group_num,
        compute_dtype=jnp.float32, mask_mode="dense"))
    err_f32 = float(jnp.max(jnp.abs(out_f32 - ref)))
    assert jnp.allclose(out_f32, ref, atol=2e-3, rtol=2e-3), f"f32 max_err={err_f32}"

    print("KERNEL_OK")
</pallas_src>

<mosaic_0001>
module attributes {stable_mosaic.version = 11 : i64} {
  func.func @_linear_kernel(%arg0: i32, %arg1: i32, %arg2: i32, %arg3: memref<16x32xbf16, #tpu.memory_space<vmem>>, %arg4: memref<32x64xbf16, #tpu.memory_space<vmem>>, %arg5: memref<1x64xf32, #tpu.memory_space<vmem>>, %arg6: memref<16x64xbf16, #tpu.memory_space<vmem>>, %arg7: memref<16x64xf32, #tpu.memory_space<vmem>>) attributes {dimension_semantics = [#tpu.dimension_semantics<parallel>, #tpu.dimension_semantics<parallel>, #tpu.dimension_semantics<arbitrary>], iteration_bounds = array<i64: 1, 1, 1>, scalar_prefetch = 0 : i64, scratch_operands = 1 : i64, tpu.core_type = #tpu.core_type<tc>, window_params = [{transform_indices = @transform_0, window_bounds = array<i64: 16, 32>}, {transform_indices = @transform_1, window_bounds = array<i64: 32, 64>}, {transform_indices = @transform_2, window_bounds = array<i64: 1, 64>}, {transform_indices = @transform_3, window_bounds = array<i64: 16, 64>}]} {
    %c0_i32 = arith.constant 0 : i32
    %0 = arith.cmpi eq, %arg2, %c0_i32 : i32
    %1 = arith.extui %0 : i1 to i32
    %c0_i32_0 = arith.constant 0 : i32
    %2 = arith.cmpi ne, %1, %c0_i32_0 : i32
    scf.if %2 {
      %cst_10 = arith.constant 0.000000e+00 : f32
      %12 = vector.broadcast %cst_10 : f32 to vector<16x64xf32>
      %c0_11 = arith.constant 0 : index
      %c0_12 = arith.constant 0 : index
      %13 = vector.load %arg7[%c0_11, %c0_12] : memref<16x64xf32, #tpu.memory_space<vmem>>, vector<16x64xf32>
      tpu.vector_store %arg7[%c0_11, %c0_12], %12 {strides = array<i32>} : memref<16x64xf32, #tpu.memory_space<vmem>>, vector<16x64xf32>,
    } else {
    }
    %c0 = arith.constant 0 : index
    %c0_1 = arith.constant 0 : index
    %3 = vector.load %arg7[%c0, %c0_1] : memref<16x64xf32, #tpu.memory_space<vmem>>, vector<16x64xf32>
    %c0_2 = arith.constant 0 : index
    %c0_3 = arith.constant 0 : index
    %4 = vector.load %arg3[%c0_2, %c0_3] : memref<16x32xbf16, #tpu.memory_space<vmem>>, vector<16x32xbf16>
    %c0_4 = arith.constant 0 : index
    %c0_5 = arith.constant 0 : index
    %5 = vector.load %arg4[%c0_4, %c0_5] : memref<32x64xbf16, #tpu.memory_space<vmem>>, vector<32x64xbf16>
    %cst = arith.constant dense<0.000000e+00> : vector<16x64xf32>
    %6 = tpu.matmul %4, %5, %cst {dimension_numbers = #tpu.dot_dimension_numbers<[1], [0], [0], [1], [0, 0, 1, 1], [], []>} : vector<16x32xbf16>, vector<32x64xbf16>, vector<16x64xf32> -> vector<16x64xf32>
    %7 = arith.addf %3, %6 : vector<16x64xf32>
    %c0_6 = arith.constant 0 : index
    %c0_7 = arith.constant 0 : index
    %8 = vector.load %arg7[%c0_6, %c0_7] : memref<16x64xf32, #tpu.memory_space<vmem>>, vector<16x64xf32>
    tpu.vector_store %arg7[%c0_6, %c0_7], %7 {strides = array<i32>} : memref<16x64xf32, #tpu.memory_space<vmem>>, vector<16x64xf32>,
    %c0_i32_8 = arith.constant 0 : i32
    %9 = arith.cmpi eq, %arg2, %c0_i32_8 : i32
    %10 = arith.extui %9 : i1 to i32
    %c0_i32_9 = arith.constant 0 : i32
    %11 = arith.cmpi ne, %10, %c0_i32_9 : i32
    scf.if %11 {
      %c0_10 = arith.constant 0 : index
      %c0_11 = arith.constant 0 : index
      %12 = vector.load %arg7[%c0_10, %c0_11] : memref<16x64xf32, #tpu.memory_space<vmem>>, vector<16x64xf32>
      %c0_12 = arith.constant 0 : index
      %c0_13 = arith.constant 0 : index
      %13 = vector.load %arg5[%c0_12, %c0_13] : memref<1x64xf32, #tpu.memory_space<vmem>>, vector<1x64xf32>
      %14 = vector.broadcast %13 : vector<1x64xf32> to vector<16x64xf32>
      %15 = arith.addf %12, %14 : vector<16x64xf32>
      %16 = arith.truncf %15 : vector<16x64xf32> to vector<16x64xbf16>
      %c0_14 = arith.constant 0 : index
      %c0_15 = arith.constant 0 : index
      %17 = vector.load %arg6[%c0_14, %c0_15] : memref<16x64xbf16, #tpu.memory_space<vmem>>, vector<16x64xbf16>
      tpu.vector_store %arg6[%c0_14, %c0_15], %16 {strides = array<i32>} : memref<16x64xbf16, #tpu.memory_space<vmem>>, vector<16x64xbf16>,
    } else {
    }
    return
  }
  func.func @transform_0(%arg0: i32, %arg1: i32, %arg2: i32) -> (i32, i32) {
    %c0_i32 = arith.constant 0 : i32
    return %arg0, %arg2 : i32, i32
  }
  func.func @transform_1(%arg0: i32, %arg1: i32, %arg2: i32) -> (i32, i32) {
    %c0_i32 = arith.constant 0 : i32
    return %arg2, %arg1 : i32, i32
  }
  func.func @transform_2(%arg0: i32, %arg1: i32, %arg2: i32) -> (i32, i32) {
    %c0_i32 = arith.constant 0 : i32
    %c0_i32_0 = arith.constant 0 : i32
    return %c0_i32, %arg1 : i32, i32
  }
  func.func @transform_3(%arg0: i32, %arg1: i32, %arg2: i32) -> (i32, i32) {
    %c0_i32 = arith.constant 0 : i32
    return %arg0, %arg1 : i32, i32
  }
}

</mosaic_0001>

<llo_original>
// kernel: tpu_custom_call.1
$region0: #{tpu_custom_call.1}
  #allocation0 [shape = 'u32[]', space=smem, size = 0x4, offset = 0x4, fixed_abs, tag = 'smem constant byte address 0x4 - core index']
  #allocation1 [shape = 'u32[144,128]{1,0:T(1,128)}', space=vmem, size = 0x12000, scoped, tag = 'internal scratch']
  #allocation2 [shape = 'f32[16,64]{1,0:T(8,128)}', space=vmem, size = 0x2000, scoped, tag = 'scratch operand']
  %s0 = inlined_call_operand.hbm [shape: bf16[16,32], index: 0, kind: input, shape index: {}]
  %s1 = inlined_call_operand.hbm [shape: bf16[32,64], index: 1, kind: input, shape index: {}]
  %s2 = inlined_call_operand.vmem [shape: f32[1,64], index: 2, kind: input, shape index: {}]
  %s3 = inlined_call_operand.hbm [shape: bf16[16,64], index: 3, kind: output, shape index: {}]
  %s4 = sld [smem:[#allocation0]]
  $region38: #{tpu_custom_call.1} parent=0
    _
  %s6 = ssub.s32 1, %s4
  %s7 = scalar_select 0, %s6, %s4
  $region1: #{tpu_custom_call.1} parent=0
    #allocation3 [shape = 'u8[4096]{0}', space=vmem, size = 0x1000, scoped, tag = 'input window, operand 0, single buffered']
    #allocation4 [shape = 's32[1]{0}', space=sflag, size = 0x4, scoped, tag = 'scoped memory for tpu_custom_call.1']
    #allocation5 [shape = 's32[1]{0}', space=sflag, size = 0x4, scoped, tag = 'scoped memory for tpu_custom_call.1']
    #allocation6 [shape = 'u8[8192]{0}', space=vmem, size = 0x2000, scoped, tag = 'input window, operand 1, single buffered']
    #allocation7 [shape = 's32[1]{0}', space=sflag, size = 0x4, scoped, tag = 'scoped memory for tpu_custom_call.1']
    #allocation8 [shape = 'u8[4096]{0}', space=vmem, size = 0x1000, scoped, tag = 'output window, operand 0, single buffered']
    %8 = vsyncpa [#allocation4], 0
    %9 = vsyncpa [#allocation7], 0
    %10 = vsyncpa [#allocation5], 0
    // Predicated region
    $region2: #{tpu_custom_call.1} parent=1 // pred_check
      _
    $region3: #{tpu_custom_call.1} parent=1 // pred_check_branch
      %12 = sbr.rel (0) target = $region5
    $region4: #{tpu_custom_call.1} parent=1 // pred_region
      %s14 = ssub.s32 128, 128
      %15 = vsyncadd [#allocation4], %s14
      %s16 = sshll.u32 [#allocation3], 4
      %s17 = int_to_ptr.vmem [resolvable:$true] %s16
      %22 = dma.hbm_to_vmem [thread:$0]  %s0, 128, %s17, [#allocation4], 64, 64, 4
    $region5: #{tpu_custom_call.1} parent=1 // pred_fallthru
      _
    // Predicated region
    $region6: #{tpu_custom_call.1} parent=1 // pred_check
      _
    $region7: #{tpu_custom_call.1} parent=1 // pred_check_branch
      %24 = sbr.rel (0) target = $region9
    $region8: #{tpu_custom_call.1} parent=1 // pred_region
      %s26 = ssub.s32 256, 256
      %27 = vsyncadd [#allocation7], %s26
      %s28 = sshll.u32 [#allocation6], 4
      %s29 = int_to_ptr.vmem [resolvable:$true] %s28
      %34 = dma.hbm_to_vmem [thread:$0]  %s1, 256, %s29, [#allocation7], 64, 64, 4
    $region9: #{tpu_custom_call.1} parent=1 // pred_fallthru
      _
    // Predicated region
    $region10: #{tpu_custom_call.1} parent=1 // pred_check
      _
    $region11: #{tpu_custom_call.1} parent=1 // pred_check_branch
      %36 = sbr.rel (0) target = $region13
    $region12: #{tpu_custom_call.1} parent=1 // pred_region
      _
    $region13: #{tpu_custom_call.1} parent=1 // pred_fallthru
      _
    // Predicated region
    $region14: #{tpu_custom_call.1} parent=1 // pred_check
      _
    $region15: #{tpu_custom_call.1} parent=1 // pred_check_branch
      %38 = sbr.rel (0) target = $region17
    $region16: #{tpu_custom_call.1} parent=1 // pred_region
      %39 = dma.done [#allocation4], 128
    $region17: #{tpu_custom_call.1} parent=1 // pred_fallthru
      _
    // Predicated region
    $region18: #{tpu_custom_call.1} parent=1 // pred_check
      _
    $region19: #{tpu_custom_call.1} parent=1 // pred_check_branch
      %41 = sbr.rel (0) target = $region21
    $region20: #{tpu_custom_call.1} parent=1 // pred_region
      %42 = dma.done [#allocation7], 256
    $region21: #{tpu_custom_call.1} parent=1 // pred_fallthru
      _
    %p44 = scmp.eq.s32.totalorder 0, 0
    // Predicated region
    $region22: #{tpu_custom_call.1} parent=1 // pred_check
      %p45 = pneg %p44
    $region23: #{tpu_custom_call.1} parent=1 // pred_check_branch
      %47 = sbr.rel (%p45) target = $region25
    $region24: #{tpu_custom_call.1} parent=1 // pred_region
      %vm48 = vcmask 523264
      %49 = vst.msk [vmem:[#allocation2] sm:$0xff] %vm48, 0.0
      %50 = vst.msk [vmem:[#allocation2 + $0x8] sm:$0xff] %vm48, 0.0
    $region25: #{tpu_custom_call.1} parent=1 // pred_fallthru
      _
    %v51 = vld [vmem:[#allocation2] sm:$0xff]
    %v52 = vld [vmem:[#allocation2 + $0x8] sm:$0xff]
    %v53 = vld [vmem:[#allocation3] sm:$0xf]
    %v54 = vld [vmem:[#allocation3 + $0x4] sm:$0xf]
    %v55 = vld [vmem:[#allocation6] sm:$0xf]
    %v56 = vld [vmem:[#allocation6 + $0x4] sm:$0xf]
    %v57 = vld [vmem:[#allocation6 + $0x8] sm:$0xf]
    %v58 = vld [vmem:[#allocation6 + $0xc] sm:$0xf]
    %v61 = vunpack.c.l.b16 %v53
    %v62 = vunpack.c.l.b16 %v54
    %v63 = vpack.c.b16 %v62, %v61
    %v68 = vunpack.c.l.b16 %v55
    %v69 = vunpack.c.l.b16 %v56
    %v70 = vunpack.c.l.b16 %v57
    %v71 = vunpack.c.l.b16 %v58
    %v72 = vpack.c.b16 %v69, %v68
    %v73 = vpack.c.b16 %v71, %v70
    %vm76 = vcmask 261120
    %v78 = vsel %vm76, %v63, 0
    %80 = vmatprep.subr.bf16.mxu0 0
    %81 = vmatpush1.bf16.msra.mxu0 0
    %82 = vmatprep.subr.bf16.mxu0 0
    %83 = vmatpush1.bf16.msra.mxu0 0
    %84 = vmatprep.subr.bf16.mxu0 0
    %85 = vmatpush1.bf16.msra.mxu0 0
    %86 = vmatprep.subr.bf16.mxu0 0
    %87 = vmatpush1.bf16.msra.mxu0 0
    %88 = vmatprep.subr.bf16.mxu0 0
    %89 = vmatpush1.bf16.msra.mxu0 0
    %90 = vmatprep.subr.bf16.mxu0 0
    %91 = vmatpush1.bf16.msra.mxu0 0
    %92 = vmatprep.subr.bf16.mxu0 0
    %93 = vmatpush1.bf16.msra.mxu0 %v73
    %94 = vmatprep.subr.bf16.mxu0 0
    %95 = vmatpush1.bf16.msra.mxu0 %v72
    %96 = vmatprep.subr.bf16.mxu0 0
    %97 = vmatpush2.bf16.msra.mxu0 0
    %98 = vmatprep.subr.bf16.mxu0 0
    %99 = vmatpush2.bf16.msra.mxu0 0
    %100 = vmatprep.subr.bf16.mxu0 0
    %101 = vmatpush2.bf16.msra.mxu0 0
    %102 = vmatprep.subr.bf16.mxu0 0
    %103 = vmatpush2.bf16.msra.mxu0 0
    %104 = vmatprep.subr.bf16.mxu0 0
    %105 = vmatpush2.bf16.msra.mxu0 0
    %106 = vmatprep.subr.bf16.mxu0 0
    %107 = vmatpush2.bf16.msra.mxu0 0
    %108 = vmatprep.subr.bf16.mxu0 0
    %109 = vmatpush2.bf16.msra.mxu0 0
    %110 = vmatprep.subr.bf16.mxu0 0
    %111 = vmatpush2.bf16.msra.mxu0 0
    %112 = vmatprep.mubr.bf16.mxu0 0
    %113 = vmatmul.mubr.bf16.gmra.mxu0 %v78
    %v114 = vpop.f32.mrf.mxu0
    %v115 = vadd.f32 0.0, %v114
    %v116 = vpop.f32.mrf.mxu0
    %v117 = vpop.f32.mrf.mxu0
    %v118 = vadd.f32 0.0, %v117
    %v119 = vpop.f32.mrf.mxu0
    %120 = vdwg.mxu0
    %v121 = vadd.f32 %v51, %v115
    %v122 = vadd.f32 %v52, %v118
    %vm123 = vcmask 523264
    %124 = vst.msk [vmem:[#allocation2] sm:$0xff] %vm123, %v121
    %125 = vst.msk [vmem:[#allocation2 + $0x8] sm:$0xff] %vm123, %v122
    // Predicated region
    $region26: #{tpu_custom_call.1} parent=1 // pred_check
      %p126 = pneg %p44
    $region27: #{tpu_custom_call.1} parent=1 // pred_check_branch
      %128 = sbr.rel (%p126) target = $region29
    $region28: #{tpu_custom_call.1} parent=1 // pred_region
      %v129 = vld [vmem:[#allocation2] sm:$0xff]
      %v130 = vld [vmem:[#allocation2 + $0x8] sm:$0xff]
      %v131 = vld [vmem:[%s2] sm:$0x1]
      %v133 = vlaneseq
      %v134 = vshrl.u32 %v133, 7
      %v135 = vsub.s32 0, %v134
      %v136 = vrot.slane %v131, %v135
      %v138 = vadd.f32 %v129, %v136
      %v139 = vadd.f32 %v130, %v136
      %v140 = vpack.c.bf16 %v139, %v138
      %v142 = vunpack.c.l.b16 %v140
      %v143 = vunpack.c.h.b16 %v140
      %v144 = vpack.c.b16 %v142, %v142
      %v145 = vpack.c.b16 %v143, %v143
      %vm148 = vcmask 519168
      %149 = vst.msk [vmem:[#allocation8] sm:$0xf] %vm148, %v144
      %150 = vst.msk [vmem:[#allocation8 + $0x4] sm:$0xf] %vm148, %v145
    $region29: #{tpu_custom_call.1} parent=1 // pred_fallthru
      _
    // Predicated region
    $region30: #{tpu_custom_call.1} parent=1 // pred_check
      _
    $region31: #{tpu_custom_call.1} parent=1 // pred_check_branch
      %152 = sbr.rel (0) target = $region33
    $region32: #{tpu_custom_call.1} parent=1 // pred_region
      %s154 = ssub.s32 128, 128
      %155 = vsyncadd [#allocation5], %s154
      %s156 = sshll.u32 [#allocation8], 4
      %s157 = int_to_ptr.vmem [resolvable:$true] %s156
      %162 = dma.vmem_to_hbm [thread:$0]  %s157, 128, %s3, [#allocation5], 64, 64, 4
    $region33: #{tpu_custom_call.1} parent=1 // pred_fallthru
      _
    // Predicated region
    $region34: #{tpu_custom_call.1} parent=1 // pred_check
      _
    $region35: #{tpu_custom_call.1} parent=1 // pred_check_branch
      %164 = sbr.rel (0) target = $region37
    $region36: #{tpu_custom_call.1} parent=1 // pred_region
      %165 = dma.done [#allocation5], 128
    $region37: #{tpu_custom_call.1} parent=1 // pred_fallthru
      _
    %166 = vsyncpa [#allocation4], 1
    %167 = vsyncpa [#allocation7], 1
    %168 = vsyncpa [#allocation5], 1

</llo_original>
